<compile_context>
chip_gen: v7x
topology: tpu7x:2x2x1
jax: 0.10.0
libtpu: 0.0.40
codegen_flags: <defaults>
</compile_context>

<pallas_src>
import functools

import jax
import jax.numpy as jnp
from jax.experimental import pallas as pl
from jax.experimental.pallas import tpu as pltpu


def _bert_output_kernel(h_ref, res_ref, w_ref, p_ref, o_ref, *, eps):
    # Dense: cast the f32 activation tile to bf16 on the VPU (hidden under the MXU),
    # bf16 x bf16 -> f32 accumulation on the MXU.
    x = jnp.dot(h_ref[...].astype(jnp.bfloat16), w_ref[...],
                preferred_element_type=jnp.float32)

    bias = p_ref[0:1, :]     # (1, H) f32
    gamma = p_ref[1:2, :]    # (1, H) f32
    beta = p_ref[2:3, :]     # (1, H) f32

    # TODO(synk): dropout omitted (inference / eval-mode identity); training-mode
    # dropout would use pltpu.prng_seed + pltpu.stateful_bernoulli here.
    y = x + bias + res_ref[...].astype(jnp.float32)   # bias + residual, f32

    # LayerNorm over the hidden axis — two-pass (mean, then centered variance):
    # numerically safe, and the extra VPU sweep sits in slack under the MXU step.
    mean = jnp.mean(y, axis=-1, keepdims=True)
    yc = y - mean
    var = jnp.mean(yc * yc, axis=-1, keepdims=True)
    inv = jax.lax.rsqrt(var + eps)
    o_ref[...] = (yc * inv * gamma + beta).astype(o_ref.dtype)


def _round_up(a, b):
    return (a + b - 1) // b * b


def _build_call(M, I, H, h_dtype, res_dtype, out_dtype, *, eps, tm_eff, grid_m,
                single_buffer_resident):
    # Resident operands (constant index_map): single-buffer when supported — halves
    # the weight's VMEM footprint (matters most on v7x's 64 MiB per-TC VMEM).
    if single_buffer_resident:
        resident_kw = dict(pipeline_mode=pl.Buffered(1))
        w_bufs = 1
    else:
        resident_kw = {}
        w_bufs = 2

    h_bytes = jnp.dtype(h_dtype).itemsize
    res_bytes = jnp.dtype(res_dtype).itemsize
    out_bytes = jnp.dtype(out_dtype).itemsize

    # VMEM working set (streamed operands are double-buffered by the pipeliner).
    est = (2 * tm_eff * I * h_bytes          # activation tiles (f32 in, cast in-kernel)
           + 2 * tm_eff * H * res_bytes      # residual tiles
           + 2 * tm_eff * H * out_bytes      # output tiles
           + w_bufs * I * H * 2              # resident bf16 weight
           + w_bufs * 8 * H * 4)             # packed bias/gamma/beta
    # 1.5x + 1 MiB headroom; cap at 48 MiB so v7x keeps compiler-scratch headroom.
    vmem_limit = int(min(max(est * 3 // 2 + (1 << 20), 16 << 20), 48 << 20))

    kernel = functools.partial(_bert_output_kernel, eps=eps)

    return pl.pallas_call(
        kernel,
        out_shape=jax.ShapeDtypeStruct((M, H), out_dtype),
        grid_spec=pltpu.PrefetchScalarGridSpec(
            num_scalar_prefetch=0,
            grid=(grid_m,),
            in_specs=[
                pl.BlockSpec((tm_eff, I), lambda i: (i, 0)),              # activations (f32)
                pl.BlockSpec((tm_eff, H), lambda i: (i, 0)),              # residual
                pl.BlockSpec((I, H), lambda i: (0, 0), **resident_kw),    # resident bf16 weight
                pl.BlockSpec((8, H), lambda i: (0, 0), **resident_kw),    # bias/gamma/beta
            ],
            out_specs=pl.BlockSpec((tm_eff, H), lambda i: (i, 0)),
        ),
        compiler_params=pltpu.CompilerParams(
            dimension_semantics=("parallel",),   # M grid shards across v7x's 2 TensorCores
            vmem_limit_bytes=vmem_limit),
    )


def vanilla_bert_output(hidden_states, input_tensor, weight_t, bias, gamma, beta,
                        *, eps=1e-12, tm=512):
    """hidden_states: [M, I] (f32/bf16), input_tensor: [M, H], weight_t: [I, H] (== W.T)."""
    M, I = hidden_states.shape
    H = input_tensor.shape[-1]

    # Row tile: 512 amortizes per-step pipeline overhead on 128 MiB-VMEM v5e/v6e;
    # shrink for small inputs. Ragged M is handled by a masked partial last block.
    tm_eff = int(min(tm, _round_up(M, 8)))
    grid_m = pl.cdiv(M, tm_eff)

    # Weight is fetched once and kept resident -> a one-time bf16 cast here halves its
    # resident VMEM footprint. Activations stay f32 and are cast inside the kernel.
    w_bf = weight_t.astype(jnp.bfloat16)

    # Pack bias / gamma / beta into one (8, H) f32 block -> single resident DMA stream.
    params = jnp.zeros((8, H), jnp.float32)
    params = params.at[0].set(bias.astype(jnp.float32))
    params = params.at[1].set(gamma.astype(jnp.float32))
    params = params.at[2].set(beta.astype(jnp.float32))

    # Output / residual keep the caller's dtype (bf16 models get bf16 residual/output
    # DMA traffic for free); add + LN math stays f32 inside the kernel regardless.
    out_dtype = input_tensor.dtype

    args = (hidden_states, input_tensor, w_bf, params)
    common = dict(eps=eps, tm_eff=tm_eff, grid_m=grid_m)
    try:
        return _build_call(M, I, H, hidden_states.dtype, input_tensor.dtype, out_dtype,
                           single_buffer_resident=True, **common)(*args)
    except Exception:
        # Fallback for jax versions where pl.Buffered(1) on the main pipeline is rejected.
        return _build_call(M, I, H, hidden_states.dtype, input_tensor.dtype, out_dtype,
                           single_buffer_resident=False, **common)(*args)


def reference(hidden_states, input_tensor, weight_t, bias, gamma, beta, eps=1e-12):
    # True f32 module semantics: Linear -> dropout(identity, eval) -> +residual -> LayerNorm.
    x = jnp.dot(hidden_states, weight_t) + bias
    y = x + input_tensor
    mean = y.mean(-1, keepdims=True)
    var = ((y - mean) ** 2).mean(-1, keepdims=True)
    return (y - mean) * jax.lax.rsqrt(var + eps) * gamma + beta


if __name__ == "__main__":
    # Module config (small, synthetic, lane-dense): hidden_size=128, intermediate_size=256,
    # repl_norm_ident=False, layer_norm_eps=1e-12, hidden_dropout_prob=0.1 (eval -> identity).
    batch, seq, hidden, inter = 2, 8, 128, 256
    eps = 1e-12

    key = jax.random.PRNGKey(0)
    k1, k2, k3, k4, k5, k6 = jax.random.split(key, 6)

    bound = 1.0 / (inter ** 0.5)
    weight_t = jax.random.uniform(k1, (inter, hidden), jnp.float32, -bound, bound)  # W.T
    bias = jax.random.uniform(k2, (hidden,), jnp.float32, -bound, bound)
    gamma = 1.0 + 0.1 * jax.random.normal(k5, (hidden,), jnp.float32)
    beta = 0.1 * jax.random.normal(k6, (hidden,), jnp.float32)

    # Inputs: hidden_states [B, S, I], input_tensor [B, S, H]
    hidden_states = jax.random.normal(k3, (batch, seq, inter), jnp.float32)
    input_tensor = jax.random.normal(k4, (batch, seq, hidden), jnp.float32)

    h2 = hidden_states.reshape(batch * seq, inter)
    r2 = input_tensor.reshape(batch * seq, hidden)

    out = vanilla_bert_output(h2, r2, weight_t, bias, gamma, beta, eps=eps)
    out = jax.block_until_ready(out)
    out3 = out.reshape(batch, seq, hidden)

    ref = reference(h2, r2, weight_t, bias, gamma, beta, eps).reshape(batch, seq, hidden)
    # Tolerance covers the kernel's bf16 MXU operands vs. the f32 module reference.
    assert jnp.allclose(out3, ref, atol=2.5e-2, rtol=2.5e-2), "mismatch vs reference"

    print("KERNEL_OK")
</pallas_src>

<mosaic_0001>
module attributes {stable_mosaic.version = 11 : i64} {
  func.func @_bert_output_kernel(%arg0: i32, %arg1: memref<16x256xf32, #tpu.memory_space<vmem>>, %arg2: memref<16x128xf32, #tpu.memory_space<vmem>>, %arg3: memref<256x128xbf16, #tpu.memory_space<vmem>>, %arg4: memref<8x128xf32, #tpu.memory_space<vmem>>, %arg5: memref<16x128xf32, #tpu.memory_space<vmem>>) attributes {dimension_semantics = [#tpu.dimension_semantics<parallel>], iteration_bounds = array<i64: 1>, scalar_prefetch = 0 : i64, scratch_operands = 0 : i64, tpu.core_type = #tpu.core_type<tc>, window_params = [{transform_indices = @transform_0, window_bounds = array<i64: 16, 256>}, {transform_indices = @transform_1, window_bounds = array<i64: 16, 128>}, {pipeline_mode = #tpu.pipeline_mode<synchronous>, transform_indices = @transform_2, window_bounds = array<i64: 256, 128>}, {pipeline_mode = #tpu.pipeline_mode<synchronous>, transform_indices = @transform_3, window_bounds = array<i64: 8, 128>}, {transform_indices = @transform_4, window_bounds = array<i64: 16, 128>}]} {
    %c0 = arith.constant 0 : index
    %c0_0 = arith.constant 0 : index
    %0 = vector.load %arg1[%c0, %c0_0] : memref<16x256xf32, #tpu.memory_space<vmem>>, vector<16x256xf32>
    %1 = arith.truncf %0 : vector<16x256xf32> to vector<16x256xbf16>
    %c0_1 = arith.constant 0 : index
    %c0_2 = arith.constant 0 : index
    %2 = vector.load %arg3[%c0_1, %c0_2] : memref<256x128xbf16, #tpu.memory_space<vmem>>, vector<256x128xbf16>
    %cst = arith.constant dense<0.000000e+00> : vector<16x128xf32>
    %3 = tpu.matmul %1, %2, %cst {dimension_numbers = #tpu.dot_dimension_numbers<[1], [0], [0], [1], [0, 0, 1, 1], [], []>} : vector<16x256xbf16>, vector<256x128xbf16>, vector<16x128xf32> -> vector<16x128xf32>
    %c0_3 = arith.constant 0 : index
    %c0_4 = arith.constant 0 : index
    %4 = vector.load %arg4[%c0_3, %c0_4] : memref<8x128xf32, #tpu.memory_space<vmem>>, vector<1x128xf32>
    %c1 = arith.constant 1 : index
    %c0_5 = arith.constant 0 : index
    %5 = vector.load %arg4[%c1, %c0_5] : memref<8x128xf32, #tpu.memory_space<vmem>>, vector<1x128xf32>
    %c2 = arith.constant 2 : index
    %c0_6 = arith.constant 0 : index
    %6 = vector.load %arg4[%c2, %c0_6] : memref<8x128xf32, #tpu.memory_space<vmem>>, vector<1x128xf32>
    %7 = vector.broadcast %4 : vector<1x128xf32> to vector<16x128xf32>
    %8 = arith.addf %3, %7 : vector<16x128xf32>
    %c0_7 = arith.constant 0 : index
    %c0_8 = arith.constant 0 : index
    %9 = vector.load %arg2[%c0_7, %c0_8] : memref<16x128xf32, #tpu.memory_space<vmem>>, vector<16x128xf32>
    %10 = arith.addf %8, %9 : vector<16x128xf32>
    %cst_9 = arith.constant dense<0.000000e+00> : vector<16xf32>
    %11 = vector.multi_reduction <add>, %10, %cst_9 [1] : vector<16x128xf32> to vector<16xf32>
    %12 = vector.shape_cast %11 : vector<16xf32> to vector<16x1xf32>
    %cst_10 = arith.constant 1.280000e+02 : f32
    %13 = vector.broadcast %cst_10 : f32 to vector<16x1xf32>
    %14 = arith.divf %12, %13 : vector<16x1xf32>
    %15 = vector.broadcast %14 : vector<16x1xf32> to vector<16x128xf32>
    %16 = arith.subf %10, %15 : vector<16x128xf32>
    %17 = arith.mulf %16, %16 : vector<16x128xf32>
    %cst_11 = arith.constant dense<0.000000e+00> : vector<16xf32>
    %18 = vector.multi_reduction <add>, %17, %cst_11 [1] : vector<16x128xf32> to vector<16xf32>
    %19 = vector.shape_cast %18 : vector<16xf32> to vector<16x1xf32>
    %cst_12 = arith.constant 1.280000e+02 : f32
    %20 = vector.broadcast %cst_12 : f32 to vector<16x1xf32>
    %21 = arith.divf %19, %20 : vector<16x1xf32>
    %cst_13 = arith.constant 9.99999996E-13 : f32
    %22 = vector.broadcast %cst_13 : f32 to vector<16x1xf32>
    %23 = arith.addf %21, %22 : vector<16x1xf32>
    %24 = math.rsqrt %23 : vector<16x1xf32>
    %25 = vector.broadcast %24 : vector<16x1xf32> to vector<16x128xf32>
    %26 = arith.mulf %16, %25 : vector<16x128xf32>
    %27 = vector.broadcast %5 : vector<1x128xf32> to vector<16x128xf32>
    %28 = arith.mulf %26, %27 : vector<16x128xf32>
    %29 = vector.broadcast %6 : vector<1x128xf32> to vector<16x128xf32>
    %30 = arith.addf %28, %29 : vector<16x128xf32>
    %c0_14 = arith.constant 0 : index
    %c0_15 = arith.constant 0 : index
    %31 = vector.load %arg5[%c0_14, %c0_15] : memref<16x128xf32, #tpu.memory_space<vmem>>, vector<16x128xf32>
    tpu.vector_store %arg5[%c0_14, %c0_15], %30 {strides = array<i32>} : memref<16x128xf32, #tpu.memory_space<vmem>>, vector<16x128xf32>,
    return
  }
  func.func @transform_0(%arg0: i32) -> (i32, i32) {
    %c0_i32 = arith.constant 0 : i32
    %c0_i32_0 = arith.constant 0 : i32
    return %arg0, %c0_i32 : i32, i32
  }
  func.func @transform_1(%arg0: i32) -> (i32, i32) {
    %c0_i32 = arith.constant 0 : i32
    %c0_i32_0 = arith.constant 0 : i32
    return %arg0, %c0_i32 : i32, i32
  }
  func.func @transform_2(%arg0: i32) -> (i32, i32) {
    %c0_i32 = arith.constant 0 : i32
    %c0_i32_0 = arith.constant 0 : i32
    %c0_i32_1 = arith.constant 0 : i32
    return %c0_i32, %c0_i32_0 : i32, i32
  }
  func.func @transform_3(%arg0: i32) -> (i32, i32) {
    %c0_i32 = arith.constant 0 : i32
    %c0_i32_0 = arith.constant 0 : i32
    %c0_i32_1 = arith.constant 0 : i32
    return %c0_i32, %c0_i32_0 : i32, i32
  }
  func.func @transform_4(%arg0: i32) -> (i32, i32) {
    %c0_i32 = arith.constant 0 : i32
    %c0_i32_0 = arith.constant 0 : i32
    return %arg0, %c0_i32 : i32, i32
  }
}

module attributes {stable_mosaic.version = 11 : i64} {
  func.func @_bert_output_kernel(%arg0: i32, %arg1: memref<16x256xf32, #tpu.memory_space<vmem>>, %arg2: memref<16x128xf32, #tpu.memory_space<vmem>>, %arg3: memref<256x128xbf16, #tpu.memory_space<vmem>>, %arg4: memref<8x128xf32, #tpu.memory_space<vmem>>, %arg5: memref<16x128xf32, #tpu.memory_space<vmem>>) attributes {dimension_semantics = [#tpu.dimension_semantics<parallel>], iteration_bounds = array<i64: 1>, scalar_prefetch = 0 : i64, scratch_operands = 0 : i64, tpu.core_type = #tpu.core_type<tc>, window_params = [{transform_indices = @transform_0, window_bounds = array<i64: 16, 256>}, {transform_indices = @transform_1, window_bounds = array<i64: 16, 128>}, {pipeline_mode = #tpu.pipeline_mode<synchronous>, transform_indices = @transform_2, window_bounds = array<i64: 256, 128>}, {pipeline_mode = #tpu.pipeline_mode<synchronous>, transform_indices = @transform_3, window_bounds = array<i64: 8, 128>}, {transform_indices = @transform_4, window_bounds = array<i64: 16, 128>}]} {
    %c0 = arith.constant 0 : index
    %c0_0 = arith.constant 0 : index
    %0 = vector.load %arg1[%c0, %c0_0] : memref<16x256xf32, #tpu.memory_space<vmem>>, vector<16x256xf32>
    %1 = arith.truncf %0 : vector<16x256xf32> to vector<16x256xbf16>
    %c0_1 = arith.constant 0 : index
    %c0_2 = arith.constant 0 : index
    %2 = vector.load %arg3[%c0_1, %c0_2] : memref<256x128xbf16, #tpu.memory_space<vmem>>, vector<256x128xbf16>
    %cst = arith.constant dense<0.000000e+00> : vector<16x128xf32>
    %3 = tpu.matmul %1, %2, %cst {dimension_numbers = #tpu.dot_dimension_numbers<[1], [0], [0], [1], [0, 0, 1, 1], [], []>} : vector<16x256xbf16>, vector<256x128xbf16>, vector<16x128xf32> -> vector<16x128xf32>
    %c0_3 = arith.constant 0 : index
    %c0_4 = arith.constant 0 : index
    %4 = vector.load %arg4[%c0_3, %c0_4] : memref<8x128xf32, #tpu.memory_space<vmem>>, vector<1x128xf32>
    %c1 = arith.constant 1 : index
    %c0_5 = arith.constant 0 : index
    %5 = vector.load %arg4[%c1, %c0_5] : memref<8x128xf32, #tpu.memory_space<vmem>>, vector<1x128xf32>
    %c2 = arith.constant 2 : index
    %c0_6 = arith.constant 0 : index
    %6 = vector.load %arg4[%c2, %c0_6] : memref<8x128xf32, #tpu.memory_space<vmem>>, vector<1x128xf32>
    %7 = vector.broadcast %4 : vector<1x128xf32> to vector<16x128xf32>
    %8 = arith.addf %3, %7 : vector<16x128xf32>
    %c0_7 = arith.constant 0 : index
    %c0_8 = arith.constant 0 : index
    %9 = vector.load %arg2[%c0_7, %c0_8] : memref<16x128xf32, #tpu.memory_space<vmem>>, vector<16x128xf32>
    %10 = arith.addf %8, %9 : vector<16x128xf32>
    %cst_9 = arith.constant dense<0.000000e+00> : vector<16xf32>
    %11 = vector.multi_reduction <add>, %10, %cst_9 [1] : vector<16x128xf32> to vector<16xf32>
    %12 = vector.shape_cast %11 : vector<16xf32> to vector<16x1xf32>
    %cst_10 = arith.constant 1.280000e+02 : f32
    %13 = vector.broadcast %cst_10 : f32 to vector<16x1xf32>
    %14 = arith.divf %12, %13 : vector<16x1xf32>
    %15 = vector.broadcast %14 : vector<16x1xf32> to vector<16x128xf32>
    %16 = arith.subf %10, %15 : vector<16x128xf32>
    %17 = arith.mulf %16, %16 : vector<16x128xf32>
    %cst_11 = arith.constant dense<0.000000e+00> : vector<16xf32>
    %18 = vector.multi_reduction <add>, %17, %cst_11 [1] : vector<16x128xf32> to vector<16xf32>
    %19 = vector.shape_cast %18 : vector<16xf32> to vector<16x1xf32>
    %cst_12 = arith.constant 1.280000e+02 : f32
    %20 = vector.broadcast %cst_12 : f32 to vector<16x1xf32>
    %21 = arith.divf %19, %20 : vector<16x1xf32>
    %cst_13 = arith.constant 9.99999996E-13 : f32
    %22 = vector.broadcast %cst_13 : f32 to vector<16x1xf32>
    %23 = arith.addf %21, %22 : vector<16x1xf32>
    %24 = math.rsqrt %23 : vector<16x1xf32>
    %25 = vector.broadcast %24 : vector<16x1xf32> to vector<16x128xf32>
    %26 = arith.mulf %16, %25 : vector<16x128xf32>
    %27 = vector.broadcast %5 : vector<1x128xf32> to vector<16x128xf32>
    %28 = arith.mulf %26, %27 : vector<16x128xf32>
    %29 = vector.broadcast %6 : vector<1x128xf32> to vector<16x128xf32>
    %30 = arith.addf %28, %29 : vector<16x128xf32>
    %c0_14 = arith.constant 0 : index
    %c0_15 = arith.constant 0 : index
    %31 = vector.load %arg5[%c0_14, %c0_15] : memref<16x128xf32, #tpu.memory_space<vmem>>, vector<16x128xf32>
    tpu.vector_store %arg5[%c0_14, %c0_15], %30 {strides = array<i32>} : memref<16x128xf32, #tpu.memory_space<vmem>>, vector<16x128xf32>,
    return
  }
  func.func @transform_0(%arg0: i32) -> (i32, i32) {
    %c0_i32 = arith.constant 0 : i32
    %c0_i32_0 = arith.constant 0 : i32
    return %arg0, %c0_i32 : i32, i32
  }
  func.func @transform_1(%arg0: i32) -> (i32, i32) {
    %c0_i32 = arith.constant 0 : i32
    %c0_i32_0 = arith.constant 0 : i32
    return %arg0, %c0_i32 : i32, i32
  }
  func.func @transform_2(%arg0: i32) -> (i32, i32) {
    %c0_i32 = arith.constant 0 : i32
    %c0_i32_0 = arith.constant 0 : i32
    %c0_i32_1 = arith.constant 0 : i32
    return %c0_i32, %c0_i32_0 : i32, i32
  }
  func.func @transform_3(%arg0: i32) -> (i32, i32) {
    %c0_i32 = arith.constant 0 : i32
    %c0_i32_0 = arith.constant 0 : i32
    %c0_i32_1 = arith.constant 0 : i32
    return %c0_i32, %c0_i32_0 : i32, i32
  }
  func.func @transform_4(%arg0: i32) -> (i32, i32) {
    %c0_i32 = arith.constant 0 : i32
    %c0_i32_0 = arith.constant 0 : i32
    return %arg0, %c0_i32 : i32, i32
  }
}

</mosaic_0001>

<llo_original>
// kernel: tpu_custom_call.1
$region0: #{tpu_custom_call.1}
  #allocation0 [shape = 'u32[]', space=smem, size = 0x4, offset = 0x4, fixed_abs, tag = 'smem constant byte address 0x4 - core index']
  #allocation1 [shape = 'u32[144,128]{1,0:T(1,128)}', space=vmem, size = 0x12000, scoped, tag = 'internal scratch']
  %s0 = inlined_call_operand.hbm [shape: f32[16,256], index: 0, kind: input, shape index: {}]
  %s1 = inlined_call_operand.hbm [shape: f32[16,128], index: 1, kind: input, shape index: {}]
  %s2 = inlined_call_operand.hbm [shape: bf16[256,128], index: 2, kind: input, shape index: {}]
  %s3 = inlined_call_operand.vmem [shape: f32[8,128], index: 3, kind: input, shape index: {}]
  %s4 = inlined_call_operand.hbm [shape: f32[16,128], index: 4, kind: output, shape index: {}]
  %s5 = sld [smem:[#allocation0]]
  $region38: #{tpu_custom_call.1} parent=0
    _
  %s7 = ssub.s32 1, %s5
  %s8 = scalar_select 0, %s7, %s5
  $region1: #{tpu_custom_call.1} parent=0
    #allocation2 [shape = 'u8[16384]{0}', space=vmem, size = 0x4000, scoped, tag = 'input window, operand 0, single buffered']
    #allocation3 [shape = 's32[1]{0}', space=sflag, size = 0x4, scoped, tag = 'scoped memory for tpu_custom_call.1']
    #allocation4 [shape = 's32[1]{0}', space=sflag, size = 0x4, scoped, tag = 'scoped memory for tpu_custom_call.1']
    #allocation5 [shape = 'u8[8192]{0}', space=vmem, size = 0x2000, scoped, tag = 'input window, operand 1, single buffered']
    #allocation6 [shape = 's32[1]{0}', space=sflag, size = 0x4, scoped, tag = 'scoped memory for tpu_custom_call.1']
    #allocation7 [shape = 'u8[65536]{0}', space=vmem, size = 0x10000, scoped, tag = 'input window, operand 2, single buffered']
    #allocation8 [shape = 'u8[8192]{0}', space=vmem, size = 0x2000, scoped, tag = 'output window, operand 0, single buffered']
    %9 = vsyncpa [#allocation3], 0
    %10 = vsyncpa [#allocation6], 0
    %11 = vsyncpa [#allocation4], 0
    // Predicated region
    $region2: #{tpu_custom_call.1} parent=1 // pred_check
      _
    $region3: #{tpu_custom_call.1} parent=1 // pred_check_branch
      %13 = sbr.rel (0) target = $region5
    $region4: #{tpu_custom_call.1} parent=1 // pred_region
      %s15 = ssub.s32 512, 512
      %16 = vsyncadd [#allocation3], %s15
      %s17 = sshll.u32 [#allocation2], 4
      %s18 = int_to_ptr.vmem [resolvable:$true] %s17
      %23 = dma.hbm_to_vmem [thread:$0]  %s0, 512, %s18, [#allocation3], 256, 256, 16
    $region5: #{tpu_custom_call.1} parent=1 // pred_fallthru
      _
    // Predicated region
    $region6: #{tpu_custom_call.1} parent=1 // pred_check
      _
    $region7: #{tpu_custom_call.1} parent=1 // pred_check_branch
      %25 = sbr.rel (0) target = $region9
    $region8: #{tpu_custom_call.1} parent=1 // pred_region
      %s27 = ssub.s32 256, 256
      %28 = vsyncadd [#allocation6], %s27
      %s29 = sshll.u32 [#allocation5], 4
      %s30 = int_to_ptr.vmem [resolvable:$true] %s29
      %35 = dma.hbm_to_vmem [thread:$0]  %s1, 256, %s30, [#allocation6], 128, 128, 8
    $region9: #{tpu_custom_call.1} parent=1 // pred_fallthru
      _
    // Predicated region
    $region10: #{tpu_custom_call.1} parent=1 // pred_check
      _
    $region11: #{tpu_custom_call.1} parent=1 // pred_check_branch
      %37 = sbr.rel (0) target = $region13
    $region12: #{tpu_custom_call.1} parent=1 // pred_region
      %s39 = ssub.s32 2048, 2048
      %40 = vsyncadd [#allocation6], %s39
      %s41 = sshll.u32 [#allocation7], 4
      %s42 = int_to_ptr.vmem [resolvable:$true] %s41
      %47 = dma.hbm_to_vmem [thread:$0]  %s2, 2048, %s42, [#allocation6], 64, 64, 4
    $region13: #{tpu_custom_call.1} parent=1 // pred_fallthru
      _
    // Predicated region
    $region14: #{tpu_custom_call.1} parent=1 // pred_check
      _
    $region15: #{tpu_custom_call.1} parent=1 // pred_check_branch
      %49 = sbr.rel (0) target = $region17
    $region16: #{tpu_custom_call.1} parent=1 // pred_region
      _
    $region17: #{tpu_custom_call.1} parent=1 // pred_fallthru
      _
    // Predicated region
    $region18: #{tpu_custom_call.1} parent=1 // pred_check
      _
    $region19: #{tpu_custom_call.1} parent=1 // pred_check_branch
      %51 = sbr.rel (0) target = $region21
    $region20: #{tpu_custom_call.1} parent=1 // pred_region
      %52 = dma.done [#allocation3], 512
    $region21: #{tpu_custom_call.1} parent=1 // pred_fallthru
      _
    // Predicated region
    $region22: #{tpu_custom_call.1} parent=1 // pred_check
      _
    $region23: #{tpu_custom_call.1} parent=1 // pred_check_branch
      %54 = sbr.rel (0) target = $region25
    $region24: #{tpu_custom_call.1} parent=1 // pred_region
      %55 = dma.done [#allocation6], 256
    $region25: #{tpu_custom_call.1} parent=1 // pred_fallthru
      _
    // Predicated region
    $region26: #{tpu_custom_call.1} parent=1 // pred_check
      _
    $region27: #{tpu_custom_call.1} parent=1 // pred_check_branch
      %57 = sbr.rel (0) target = $region29
    $region28: #{tpu_custom_call.1} parent=1 // pred_region
      %58 = dma.done [#allocation6], 2048
    $region29: #{tpu_custom_call.1} parent=1 // pred_fallthru
      _
    %v60 = vld [vmem:[#allocation2] sm:$0xff]
    %v61 = vld [vmem:[#allocation2 + $0x8] sm:$0xff]
    %v62 = vld [vmem:[#allocation2 + $0x10] sm:$0xff]
    %v63 = vld [vmem:[#allocation2 + $0x18] sm:$0xff]
    %v64 = vpack.c.bf16 %v62, %v60
    %v65 = vpack.c.bf16 %v63, %v61
    %v66 = vld [vmem:[#allocation7] sm:$0xf]
    %v67 = vld [vmem:[#allocation7 + $0x4] sm:$0xf]
    %v68 = vld [vmem:[#allocation7 + $0x8] sm:$0xf]
    %v69 = vld [vmem:[#allocation7 + $0xc] sm:$0xf]
    %v70 = vld [vmem:[#allocation7 + $0x10] sm:$0xf]
    %v71 = vld [vmem:[#allocation7 + $0x14] sm:$0xf]
    %v72 = vld [vmem:[#allocation7 + $0x18] sm:$0xf]
    %v73 = vld [vmem:[#allocation7 + $0x1c] sm:$0xf]
    %v74 = vld [vmem:[#allocation7 + $0x20] sm:$0xf]
    %v75 = vld [vmem:[#allocation7 + $0x24] sm:$0xf]
    %v76 = vld [vmem:[#allocation7 + $0x28] sm:$0xf]
    %v77 = vld [vmem:[#allocation7 + $0x2c] sm:$0xf]
    %v78 = vld [vmem:[#allocation7 + $0x30] sm:$0xf]
    %v79 = vld [vmem:[#allocation7 + $0x34] sm:$0xf]
    %v80 = vld [vmem:[#allocation7 + $0x38] sm:$0xf]
    %v81 = vld [vmem:[#allocation7 + $0x3c] sm:$0xf]
    %v82 = vld [vmem:[#allocation7 + $0x40] sm:$0xf]
    %v83 = vld [vmem:[#allocation7 + $0x44] sm:$0xf]
    %v84 = vld [vmem:[#allocation7 + $0x48] sm:$0xf]
    %v85 = vld [vmem:[#allocation7 + $0x4c] sm:$0xf]
    %v86 = vld [vmem:[#allocation7 + $0x50] sm:$0xf]
    %v87 = vld [vmem:[#allocation7 + $0x54] sm:$0xf]
    %v88 = vld [vmem:[#allocation7 + $0x58] sm:$0xf]
    %v89 = vld [vmem:[#allocation7 + $0x5c] sm:$0xf]
    %v90 = vld [vmem:[#allocation7 + $0x60] sm:$0xf]
    %v91 = vld [vmem:[#allocation7 + $0x64] sm:$0xf]
    %v92 = vld [vmem:[#allocation7 + $0x68] sm:$0xf]
    %v93 = vld [vmem:[#allocation7 + $0x6c] sm:$0xf]
    %v94 = vld [vmem:[#allocation7 + $0x70] sm:$0xf]
    %v95 = vld [vmem:[#allocation7 + $0x74] sm:$0xf]
    %v96 = vld [vmem:[#allocation7 + $0x78] sm:$0xf]
    %v97 = vld [vmem:[#allocation7 + $0x7c] sm:$0xf]
    %v98 = vld [vmem:[%s3] sm:$0x1]
    %v99 = vld [vmem:[%s3 + $0x1] sm:$0x1]
    %v100 = vld [vmem:[%s3 + $0x2] sm:$0x1]
    %v101 = vlaneseq
    %v102 = vshrl.u32 %v101, 7
    %v103 = vsub.s32 0, %v102
    %v104 = vrot.slane %v98, %v103
    %v137 = vunpack.c.l.b16 %v66
    %v138 = vunpack.c.l.b16 %v67
    %v139 = vunpack.c.l.b16 %v68
    %v140 = vunpack.c.l.b16 %v69
    %v141 = vunpack.c.l.b16 %v70
    %v142 = vunpack.c.l.b16 %v71
    %v143 = vunpack.c.l.b16 %v72
    %v144 = vunpack.c.l.b16 %v73
    %v145 = vunpack.c.l.b16 %v74
    %v146 = vunpack.c.l.b16 %v75
    %v147 = vunpack.c.l.b16 %v76
    %v148 = vunpack.c.l.b16 %v77
    %v149 = vunpack.c.l.b16 %v78
    %v150 = vunpack.c.l.b16 %v79
    %v151 = vunpack.c.l.b16 %v80
    %v152 = vunpack.c.l.b16 %v81
    %v153 = vunpack.c.l.b16 %v82
    %v154 = vunpack.c.l.b16 %v83
    %v155 = vunpack.c.l.b16 %v84
    %v156 = vunpack.c.l.b16 %v85
    %v157 = vunpack.c.l.b16 %v86
    %v158 = vunpack.c.l.b16 %v87
    %v159 = vunpack.c.l.b16 %v88
    %v160 = vunpack.c.l.b16 %v89
    %v161 = vunpack.c.l.b16 %v90
    %v162 = vunpack.c.l.b16 %v91
    %v163 = vunpack.c.l.b16 %v92
    %v164 = vunpack.c.l.b16 %v93
    %v165 = vunpack.c.l.b16 %v94
    %v166 = vunpack.c.l.b16 %v95
    %v167 = vunpack.c.l.b16 %v96
    %v168 = vunpack.c.l.b16 %v97
    %v169 = vpack.c.b16 %v138, %v137
    %v170 = vpack.c.b16 %v140, %v139
    %v171 = vpack.c.b16 %v142, %v141
    %v172 = vpack.c.b16 %v144, %v143
    %v173 = vpack.c.b16 %v146, %v145
    %v174 = vpack.c.b16 %v148, %v147
    %v175 = vpack.c.b16 %v150, %v149
    %v176 = vpack.c.b16 %v152, %v151
    %v177 = vpack.c.b16 %v154, %v153
    %v178 = vpack.c.b16 %v156, %v155
    %v179 = vpack.c.b16 %v158, %v157
    %v180 = vpack.c.b16 %v160, %v159
    %v181 = vpack.c.b16 %v162, %v161
    %v182 = vpack.c.b16 %v164, %v163
    %v183 = vpack.c.b16 %v166, %v165
    %v184 = vpack.c.b16 %v168, %v167
    %201 = vmatprep.subr.bf16.mxu0 0
    %202 = vmatpush1.bf16.msra.mxu0 %v169
    %203 = vmatprep.subr.bf16.mxu0 0
    %204 = vmatpush1.bf16.msra.mxu0 %v170
    %205 = vmatprep.subr.bf16.mxu0 0
    %206 = vmatpush1.bf16.msra.mxu0 %v171
    %207 = vmatprep.subr.bf16.mxu0 0
    %208 = vmatpush1.bf16.msra.mxu0 %v172
    %209 = vmatprep.subr.bf16.mxu0 0
    %210 = vmatpush1.bf16.msra.mxu0 %v173
    %211 = vmatprep.subr.bf16.mxu0 0
    %212 = vmatpush1.bf16.msra.mxu0 %v174
    %213 = vmatprep.subr.bf16.mxu0 0
    %214 = vmatpush1.bf16.msra.mxu0 %v175
    %215 = vmatprep.subr.bf16.mxu0 0
    %216 = vmatpush1.bf16.msra.mxu0 %v176
    %217 = vmatprep.subr.bf16.mxu0 0
    %218 = vmatpush1.bf16.msra.mxu0 %v177
    %219 = vmatprep.subr.bf16.mxu0 0
    %220 = vmatpush1.bf16.msra.mxu0 %v178
    %221 = vmatprep.subr.bf16.mxu0 0
    %222 = vmatpush1.bf16.msra.mxu0 %v179
    %223 = vmatprep.subr.bf16.mxu0 0
    %224 = vmatpush1.bf16.msra.mxu0 %v180
    %225 = vmatprep.subr.bf16.mxu0 0
    %226 = vmatpush1.bf16.msra.mxu0 %v181
    %227 = vmatprep.subr.bf16.mxu0 0
    %228 = vmatpush1.bf16.msra.mxu0 %v182
    %229 = vmatprep.subr.bf16.mxu0 0
    %230 = vmatpush1.bf16.msra.mxu0 %v183
    %231 = vmatprep.subr.bf16.mxu0 0
    %232 = vmatpush1.bf16.msra.mxu0 %v184
    %233 = vmatprep.mubr.bf16.mxu0 %v65
    %234 = vmatmul.mubr.bf16.gmra.mrb[0].mxu0 %v64
    %v235 = vpop.f32.mrb[0].mxu0
    %v236 = vadd.f32 %v104, %v235
    %v237 = vpop.f32.mrb[0].mxu0
    %v238 = vpop.f32.mrb[0].mxu0
    %v239 = vadd.f32 %v104, %v238
    %v240 = vpop.f32.mrb[0].mxu0
    %241 = vdwg.mxu0
    %v242 = vld [vmem:[#allocation5] sm:$0xff]
    %v243 = vld [vmem:[#allocation5 + $0x8] sm:$0xff]
    %v244 = vadd.f32 %v236, %v242
    %v245 = vadd.f32 %v239, %v243
    %246 = vadd.xlane.f32.xlu0 %v244
    %v247 = vpop.xlane.xlu0 %246
    %248 = vadd.xlane.f32.xlu0 %v245
    %v249 = vpop.xlane.xlu0 %248
    %v250 = vrcp.pop 128.0
    %v251 = vmul.f32 %v247, %v250
    %v252 = vmul.f32 %v249, %v250
    %v253 = vsub.f32 %v244, %v251
    %v254 = vsub.f32 %v245, %v252
    %v255 = vmul.f32 %v253, %v253
    %v256 = vmul.f32 %v254, %v254
    %257 = vadd.xlane.f32.xlu0 %v255
    %v258 = vpop.xlane.xlu0 %257
    %259 = vadd.xlane.f32.xlu0 %v256
    %v260 = vpop.xlane.xlu0 %259
    %v261 = vmul.f32 %v258, %v250
    %v262 = vmul.f32 %v260, %v250
    %v263 = vadd.f32 %v261, 1e-12
    %v264 = vadd.f32 %v262, 1e-12
    %v265 = vrsqrt.pop %v263
    %v266 = vrsqrt.pop %v264
    %v267 = vmul.f32 %v253, %v265
    %v268 = vmul.f32 %v254, %v266
    %v269 = vlaneseq
    %v270 = vshrl.u32 %v269, 7
    %v271 = vsub.s32 0, %v270
    %v272 = vrot.slane %v99, %v271
    %v273 = vmul.f32 %v267, %v272
    %v274 = vmul.f32 %v268, %v272
    %v275 = vlaneseq
    %v276 = vshrl.u32 %v275, 7
    %v277 = vsub.s32 0, %v276
    %v278 = vrot.slane %v100, %v277
    %v279 = vadd.f32 %v273, %v278
    %v280 = vadd.f32 %v274, %v278
    %281 = vst [vmem:[#allocation8] sm:$0xff] %v279
    %282 = vst [vmem:[#allocation8 + $0x8] sm:$0xff] %v280
    // Predicated region
    $region30: #{tpu_custom_call.1} parent=1 // pred_check
      _
    $region31: #{tpu_custom_call.1} parent=1 // pred_check_branch
      %284 = sbr.rel (0) target = $region33
    $region32: #{tpu_custom_call.1} parent=1 // pred_region
      %s286 = ssub.s32 256, 256
      %287 = vsyncadd [#allocation4], %s286
      %s288 = sshll.u32 [#allocation8], 4
      %s289 = int_to_ptr.vmem [resolvable:$true] %s288
      %294 = dma.vmem_to_hbm [thread:$0]  %s289, 256, %s4, [#allocation4], 128, 128, 8
    $region33: #{tpu_custom_call.1} parent=1 // pred_fallthru
      _
    // Predicated region
    $region34: #{tpu_custom_call.1} parent=1 // pred_check
      _
    $region35: #{tpu_custom_call.1} parent=1 // pred_check_branch
      %296 = sbr.rel (0) target = $region37
    $region36: #{tpu_custom_call.1} parent=1 // pred_region
      %297 = dma.done [#allocation4], 256
    $region37: #{tpu_custom_call.1} parent=1 // pred_fallthru
      _
    %298 = vsyncpa [#allocation3], 1
    %299 = vsyncpa [#allocation6], 1
    %300 = vsyncpa [#allocation4], 1

// kernel: tpu_custom_call.1
$region0: #{tpu_custom_call.1}
  #allocation0 [shape = 'u32[]', space=smem, size = 0x4, offset = 0x4, fixed_abs, tag = 'smem constant byte address 0x4 - core index']
  #allocation1 [shape = 'u32[144,128]{1,0:T(1,128)}', space=vmem, size = 0x12000, scoped, tag = 'internal scratch']
  %s0 = inlined_call_operand.hbm [shape: f32[16,256], index: 0, kind: input, shape index: {}]
  %s1 = inlined_call_operand.hbm [shape: f32[16,128], index: 1, kind: input, shape index: {}]
  %s2 = inlined_call_operand.hbm [shape: bf16[256,128], index: 2, kind: input, shape index: {}]
  %s3 = inlined_call_operand.vmem [shape: f32[8,128], index: 3, kind: input, shape index: {}]
  %s4 = inlined_call_operand.hbm [shape: f32[16,128], index: 4, kind: output, shape index: {}]
  %s5 = sld [smem:[#allocation0]]
  $region38: #{tpu_custom_call.1} parent=0
    _
  %s7 = ssub.s32 1, %s5
  %s8 = scalar_select 0, %s7, %s5
  $region1: #{tpu_custom_call.1} parent=0
    #allocation2 [shape = 'u8[16384]{0}', space=vmem, size = 0x4000, scoped, tag = 'input window, operand 0, single buffered']
    #allocation3 [shape = 's32[1]{0}', space=sflag, size = 0x4, scoped, tag = 'scoped memory for tpu_custom_call.1']
    #allocation4 [shape = 's32[1]{0}', space=sflag, size = 0x4, scoped, tag = 'scoped memory for tpu_custom_call.1']
    #allocation5 [shape = 'u8[8192]{0}', space=vmem, size = 0x2000, scoped, tag = 'input window, operand 1, single buffered']
    #allocation6 [shape = 's32[1]{0}', space=sflag, size = 0x4, scoped, tag = 'scoped memory for tpu_custom_call.1']
    #allocation7 [shape = 'u8[65536]{0}', space=vmem, size = 0x10000, scoped, tag = 'input window, operand 2, single buffered']
    #allocation8 [shape = 'u8[8192]{0}', space=vmem, size = 0x2000, scoped, tag = 'output window, operand 0, single buffered']
    %9 = vsyncpa [#allocation3], 0
    %10 = vsyncpa [#allocation6], 0
    %11 = vsyncpa [#allocation4], 0
    // Predicated region
    $region2: #{tpu_custom_call.1} parent=1 // pred_check
      _
    $region3: #{tpu_custom_call.1} parent=1 // pred_check_branch
      %13 = sbr.rel (0) target = $region5
    $region4: #{tpu_custom_call.1} parent=1 // pred_region
      %s15 = ssub.s32 512, 512
      %16 = vsyncadd [#allocation3], %s15
      %s17 = sshll.u32 [#allocation2], 4
      %s18 = int_to_ptr.vmem [resolvable:$true] %s17
      %23 = dma.hbm_to_vmem [thread:$0]  %s0, 512, %s18, [#allocation3], 256, 256, 16
    $region5: #{tpu_custom_call.1} parent=1 // pred_fallthru
      _
    // Predicated region
    $region6: #{tpu_custom_call.1} parent=1 // pred_check
      _
    $region7: #{tpu_custom_call.1} parent=1 // pred_check_branch
      %25 = sbr.rel (0) target = $region9
    $region8: #{tpu_custom_call.1} parent=1 // pred_region
      %s27 = ssub.s32 256, 256
      %28 = vsyncadd [#allocation6], %s27
      %s29 = sshll.u32 [#allocation5], 4
      %s30 = int_to_ptr.vmem [resolvable:$true] %s29
      %35 = dma.hbm_to_vmem [thread:$0]  %s1, 256, %s30, [#allocation6], 128, 128, 8
    $region9: #{tpu_custom_call.1} parent=1 // pred_fallthru
      _
    // Predicated region
    $region10: #{tpu_custom_call.1} parent=1 // pred_check
      _
    $region11: #{tpu_custom_call.1} parent=1 // pred_check_branch
      %37 = sbr.rel (0) target = $region13
    $region12: #{tpu_custom_call.1} parent=1 // pred_region
      %s39 = ssub.s32 2048, 2048
      %40 = vsyncadd [#allocation6], %s39
      %s41 = sshll.u32 [#allocation7], 4
      %s42 = int_to_ptr.vmem [resolvable:$true] %s41
      %47 = dma.hbm_to_vmem [thread:$0]  %s2, 2048, %s42, [#allocation6], 64, 64, 4
    $region13: #{tpu_custom_call.1} parent=1 // pred_fallthru
      _
    // Predicated region
    $region14: #{tpu_custom_call.1} parent=1 // pred_check
      _
    $region15: #{tpu_custom_call.1} parent=1 // pred_check_branch
      %49 = sbr.rel (0) target = $region17
    $region16: #{tpu_custom_call.1} parent=1 // pred_region
      _
    $region17: #{tpu_custom_call.1} parent=1 // pred_fallthru
      _
    // Predicated region
    $region18: #{tpu_custom_call.1} parent=1 // pred_check
      _
    $region19: #{tpu_custom_call.1} parent=1 // pred_check_branch
      %51 = sbr.rel (0) target = $region21
    $region20: #{tpu_custom_call.1} parent=1 // pred_region
      %52 = dma.done [#allocation3], 512
    $region21: #{tpu_custom_call.1} parent=1 // pred_fallthru
      _
    // Predicated region
    $region22: #{tpu_custom_call.1} parent=1 // pred_check
      _
    $region23: #{tpu_custom_call.1} parent=1 // pred_check_branch
      %54 = sbr.rel (0) target = $region25
    $region24: #{tpu_custom_call.1} parent=1 // pred_region
      %55 = dma.done [#allocation6], 256
    $region25: #{tpu_custom_call.1} parent=1 // pred_fallthru
      _
    // Predicated region
    $region26: #{tpu_custom_call.1} parent=1 // pred_check
      _
    $region27: #{tpu_custom_call.1} parent=1 // pred_check_branch
      %57 = sbr.rel (0) target = $region29
    $region28: #{tpu_custom_call.1} parent=1 // pred_region
      %58 = dma.done [#allocation6], 2048
    $region29: #{tpu_custom_call.1} parent=1 // pred_fallthru
      _
    %v60 = vld [vmem:[#allocation2] sm:$0xff]
    %v61 = vld [vmem:[#allocation2 + $0x8] sm:$0xff]
    %v62 = vld [vmem:[#allocation2 + $0x10] sm:$0xff]
    %v63 = vld [vmem:[#allocation2 + $0x18] sm:$0xff]
    %v64 = vpack.c.bf16 %v62, %v60
    %v65 = vpack.c.bf16 %v63, %v61
    %v66 = vld [vmem:[#allocation7] sm:$0xf]
    %v67 = vld [vmem:[#allocation7 + $0x4] sm:$0xf]
    %v68 = vld [vmem:[#allocation7 + $0x8] sm:$0xf]
    %v69 = vld [vmem:[#allocation7 + $0xc] sm:$0xf]
    %v70 = vld [vmem:[#allocation7 + $0x10] sm:$0xf]
    %v71 = vld [vmem:[#allocation7 + $0x14] sm:$0xf]
    %v72 = vld [vmem:[#allocation7 + $0x18] sm:$0xf]
    %v73 = vld [vmem:[#allocation7 + $0x1c] sm:$0xf]
    %v74 = vld [vmem:[#allocation7 + $0x20] sm:$0xf]
    %v75 = vld [vmem:[#allocation7 + $0x24] sm:$0xf]
    %v76 = vld [vmem:[#allocation7 + $0x28] sm:$0xf]
    %v77 = vld [vmem:[#allocation7 + $0x2c] sm:$0xf]
    %v78 = vld [vmem:[#allocation7 + $0x30] sm:$0xf]
    %v79 = vld [vmem:[#allocation7 + $0x34] sm:$0xf]
    %v80 = vld [vmem:[#allocation7 + $0x38] sm:$0xf]
    %v81 = vld [vmem:[#allocation7 + $0x3c] sm:$0xf]
    %v82 = vld [vmem:[#allocation7 + $0x40] sm:$0xf]
    %v83 = vld [vmem:[#allocation7 + $0x44] sm:$0xf]
    %v84 = vld [vmem:[#allocation7 + $0x48] sm:$0xf]
    %v85 = vld [vmem:[#allocation7 + $0x4c] sm:$0xf]
    %v86 = vld [vmem:[#allocation7 + $0x50] sm:$0xf]
    %v87 = vld [vmem:[#allocation7 + $0x54] sm:$0xf]
    %v88 = vld [vmem:[#allocation7 + $0x58] sm:$0xf]
    %v89 = vld [vmem:[#allocation7 + $0x5c] sm:$0xf]
    %v90 = vld [vmem:[#allocation7 + $0x60] sm:$0xf]
    %v91 = vld [vmem:[#allocation7 + $0x64] sm:$0xf]
    %v92 = vld [vmem:[#allocation7 + $0x68] sm:$0xf]
    %v93 = vld [vmem:[#allocation7 + $0x6c] sm:$0xf]
    %v94 = vld [vmem:[#allocation7 + $0x70] sm:$0xf]
    %v95 = vld [vmem:[#allocation7 + $0x74] sm:$0xf]
    %v96 = vld [vmem:[#allocation7 + $0x78] sm:$0xf]
    %v97 = vld [vmem:[#allocation7 + $0x7c] sm:$0xf]
    %v98 = vld [vmem:[%s3] sm:$0x1]
    %v99 = vld [vmem:[%s3 + $0x1] sm:$0x1]
    %v100 = vld [vmem:[%s3 + $0x2] sm:$0x1]
    %v101 = vlaneseq
    %v102 = vshrl.u32 %v101, 7
    %v103 = vsub.s32 0, %v102
    %v104 = vrot.slane %v98, %v103
    %v137 = vunpack.c.l.b16 %v66
    %v138 = vunpack.c.l.b16 %v67
    %v139 = vunpack.c.l.b16 %v68
    %v140 = vunpack.c.l.b16 %v69
    %v141 = vunpack.c.l.b16 %v70
    %v142 = vunpack.c.l.b16 %v71
    %v143 = vunpack.c.l.b16 %v72
    %v144 = vunpack.c.l.b16 %v73
    %v145 = vunpack.c.l.b16 %v74
    %v146 = vunpack.c.l.b16 %v75
    %v147 = vunpack.c.l.b16 %v76
    %v148 = vunpack.c.l.b16 %v77
    %v149 = vunpack.c.l.b16 %v78
    %v150 = vunpack.c.l.b16 %v79
    %v151 = vunpack.c.l.b16 %v80
    %v152 = vunpack.c.l.b16 %v81
    %v153 = vunpack.c.l.b16 %v82
    %v154 = vunpack.c.l.b16 %v83
    %v155 = vunpack.c.l.b16 %v84
    %v156 = vunpack.c.l.b16 %v85
    %v157 = vunpack.c.l.b16 %v86
    %v158 = vunpack.c.l.b16 %v87
    %v159 = vunpack.c.l.b16 %v88
    %v160 = vunpack.c.l.b16 %v89
    %v161 = vunpack.c.l.b16 %v90
    %v162 = vunpack.c.l.b16 %v91
    %v163 = vunpack.c.l.b16 %v92
    %v164 = vunpack.c.l.b16 %v93
    %v165 = vunpack.c.l.b16 %v94
    %v166 = vunpack.c.l.b16 %v95
    %v167 = vunpack.c.l.b16 %v96
    %v168 = vunpack.c.l.b16 %v97
    %v169 = vpack.c.b16 %v138, %v137
    %v170 = vpack.c.b16 %v140, %v139
    %v171 = vpack.c.b16 %v142, %v141
    %v172 = vpack.c.b16 %v144, %v143
    %v173 = vpack.c.b16 %v146, %v145
    %v174 = vpack.c.b16 %v148, %v147
    %v175 = vpack.c.b16 %v150, %v149
    %v176 = vpack.c.b16 %v152, %v151
    %v177 = vpack.c.b16 %v154, %v153
    %v178 = vpack.c.b16 %v156, %v155
    %v179 = vpack.c.b16 %v158, %v157
    %v180 = vpack.c.b16 %v160, %v159
    %v181 = vpack.c.b16 %v162, %v161
    %v182 = vpack.c.b16 %v164, %v163
    %v183 = vpack.c.b16 %v166, %v165
    %v184 = vpack.c.b16 %v168, %v167
    %201 = vmatprep.subr.bf16.mxu0 0
    %202 = vmatpush1.bf16.msra.mxu0 %v169
    %203 = vmatprep.subr.bf16.mxu0 0
    %204 = vmatpush1.bf16.msra.mxu0 %v170
    %205 = vmatprep.subr.bf16.mxu0 0
    %206 = vmatpush1.bf16.msra.mxu0 %v171
    %207 = vmatprep.subr.bf16.mxu0 0
    %208 = vmatpush1.bf16.msra.mxu0 %v172
    %209 = vmatprep.subr.bf16.mxu0 0
    %210 = vmatpush1.bf16.msra.mxu0 %v173
    %211 = vmatprep.subr.bf16.mxu0 0
    %212 = vmatpush1.bf16.msra.mxu0 %v174
    %213 = vmatprep.subr.bf16.mxu0 0
    %214 = vmatpush1.bf16.msra.mxu0 %v175
    %215 = vmatprep.subr.bf16.mxu0 0
    %216 = vmatpush1.bf16.msra.mxu0 %v176
    %217 = vmatprep.subr.bf16.mxu0 0
    %218 = vmatpush1.bf16.msra.mxu0 %v177
    %219 = vmatprep.subr.bf16.mxu0 0
    %220 = vmatpush1.bf16.msra.mxu0 %v178
    %221 = vmatprep.subr.bf16.mxu0 0
    %222 = vmatpush1.bf16.msra.mxu0 %v179
    %223 = vmatprep.subr.bf16.mxu0 0
    %224 = vmatpush1.bf16.msra.mxu0 %v180
    %225 = vmatprep.subr.bf16.mxu0 0
    %226 = vmatpush1.bf16.msra.mxu0 %v181
    %227 = vmatprep.subr.bf16.mxu0 0
    %228 = vmatpush1.bf16.msra.mxu0 %v182
    %229 = vmatprep.subr.bf16.mxu0 0
    %230 = vmatpush1.bf16.msra.mxu0 %v183
    %231 = vmatprep.subr.bf16.mxu0 0
    %232 = vmatpush1.bf16.msra.mxu0 %v184
    %233 = vmatprep.mubr.bf16.mxu0 %v65
    %234 = vmatmul.mubr.bf16.gmra.mrb[0].mxu0 %v64
    %v235 = vpop.f32.mrb[0].mxu0
    %v236 = vadd.f32 %v104, %v235
    %v237 = vpop.f32.mrb[0].mxu0
    %v238 = vpop.f32.mrb[0].mxu0
    %v239 = vadd.f32 %v104, %v238
    %v240 = vpop.f32.mrb[0].mxu0
    %241 = vdwg.mxu0
    %v242 = vld [vmem:[#allocation5] sm:$0xff]
    %v243 = vld [vmem:[#allocation5 + $0x8] sm:$0xff]
    %v244 = vadd.f32 %v236, %v242
    %v245 = vadd.f32 %v239, %v243
    %246 = vadd.xlane.f32.xlu0 %v244
    %v247 = vpop.xlane.xlu0 %246
    %248 = vadd.xlane.f32.xlu0 %v245
    %v249 = vpop.xlane.xlu0 %248
    %v250 = vrcp.pop 128.0
    %v251 = vmul.f32 %v247, %v250
    %v252 = vmul.f32 %v249, %v250
    %v253 = vsub.f32 %v244, %v251
    %v254 = vsub.f32 %v245, %v252
    %v255 = vmul.f32 %v253, %v253
    %v256 = vmul.f32 %v254, %v254
    %257 = vadd.xlane.f32.xlu0 %v255
    %v258 = vpop.xlane.xlu0 %257
    %259 = vadd.xlane.f32.xlu0 %v256
    %v260 = vpop.xlane.xlu0 %259
    %v261 = vmul.f32 %v258, %v250
    %v262 = vmul.f32 %v260, %v250
    %v263 = vadd.f32 %v261, 1e-12
    %v264 = vadd.f32 %v262, 1e-12
    %v265 = vrsqrt.pop %v263
    %v266 = vrsqrt.pop %v264
    %v267 = vmul.f32 %v253, %v265
    %v268 = vmul.f32 %v254, %v266
    %v269 = vlaneseq
    %v270 = vshrl.u32 %v269, 7
    %v271 = vsub.s32 0, %v270
    %v272 = vrot.slane %v99, %v271
    %v273 = vmul.f32 %v267, %v272
    %v274 = vmul.f32 %v268, %v272
    %v275 = vlaneseq
    %v276 = vshrl.u32 %v275, 7
    %v277 = vsub.s32 0, %v276
    %v278 = vrot.slane %v100, %v277
    %v279 = vadd.f32 %v273, %v278
    %v280 = vadd.f32 %v274, %v278
    %281 = vst [vmem:[#allocation8] sm:$0xff] %v279
    %282 = vst [vmem:[#allocation8 + $0x8] sm:$0xff] %v280
    // Predicated region
    $region30: #{tpu_custom_call.1} parent=1 // pred_check
      _
    $region31: #{tpu_custom_call.1} parent=1 // pred_check_branch
      %284 = sbr.rel (0) target = $region33
    $region32: #{tpu_custom_call.1} parent=1 // pred_region
      %s286 = ssub.s32 256, 256
      %287 = vsyncadd [#allocation4], %s286
      %s288 = sshll.u32 [#allocation8], 4
      %s289 = int_to_ptr.vmem [resolvable:$true] %s288
      %294 = dma.vmem_to_hbm [thread:$0]  %s289, 256, %s4, [#allocation4], 128, 128, 8
    $region33: #{tpu_custom_call.1} parent=1 // pred_fallthru
      _
    // Predicated region
    $region34: #{tpu_custom_call.1} parent=1 // pred_check
      _
    $region35: #{tpu_custom_call.1} parent=1 // pred_check_branch
      %296 = sbr.rel (0) target = $region37
    $region36: #{tpu_custom_call.1} parent=1 // pred_region
      %297 = dma.done [#allocation4], 256
    $region37: #{tpu_custom_call.1} parent=1 // pred_fallthru
      _
    %298 = vsyncpa [#allocation3], 1
    %299 = vsyncpa [#allocation6], 1
    %300 = vsyncpa [#allocation4], 1

</llo_original>
